<compile_context>
chip_gen: v5e
topology: v5e:2x2
jax: 0.10.0
libtpu: 0.0.40
codegen_flags: <defaults>
</compile_context>

<pallas_src>
import jax
import jax.numpy as jnp
import numpy as np
from jax.experimental import pallas as pl
from jax.experimental.pallas import tpu as pltpu

# ----------------------------- config (small, deterministic) -----------------
D_DRUGS = 4           # number of drug graphs
ATOMS_PER_DRUG = 8    # atoms per drug graph (contiguous per drug -> group max-pool)
N_ATOMS = D_DRUGS * ATOMS_PER_DRUG
F_IN = 16             # raw atom feature dim
EMBED_DIM = 32        # embed_dim
N_CELLS = 16          # shape[-1] for CellEmbed
NN = [64, 32]         # trip_embed hidden sizes
B_TRIPS = 256         # number of (drug_a, drug_b, cell) triplets
B_BLOCK = 128         # triplets per grid step (lane-major)
K_SEL = 2 * D_DRUGS + N_CELLS   # fused gather contraction width (drug_a|drug_b|cell)
LN_EPS = 1e-5


# =============================================================================
# Kernel A: drug / GNN encoder (grid-less, computed once per forward)
# =============================================================================
def _drug_embed_kernel(adj_ref, x_ref, w_ref, w1ab_ref, vec_ref, tab_ref):
    f32, bf16 = jnp.float32, jnp.bfloat16
    adj = adj_ref[...]                          # (N, N) bf16, row-normalized (mean)
    x = x_ref[...]                              # (N, F_IN) bf16

    def ln_lane(v, g, b):                       # LayerNorm over lane (feature) axis
        mu = jnp.mean(v, axis=-1, keepdims=True)
        c = v - mu
        var = jnp.mean(c * c, axis=-1, keepdims=True)
        return c * jax.lax.rsqrt(var + LN_EPS) * g + b

    # --- GraphSAGE layer 0: lin_l(mean_agg(x)) + lin_r(x) fused as one matmul ---
    agg = jnp.dot(adj, x, preferred_element_type=f32)                    # (N, F_IN)
    cat = jnp.concatenate([agg, x.astype(f32)], axis=-1).astype(bf16)    # (N, 2F)
    h = (jnp.dot(cat, w_ref[0:2 * F_IN, :], preferred_element_type=f32)
         + vec_ref[0:1, :])
    h = ln_lane(h, vec_ref[1:2, :], vec_ref[2:3, :])
    h = jnp.maximum(h, 0.0)                                              # (N, E) f32

    # --- GraphSAGE layer 1 (last layer: no norm / act, per PyG BasicGNN) ---
    agg = jnp.dot(adj, h.astype(bf16), preferred_element_type=f32)
    cat = jnp.concatenate([agg, h], axis=-1).astype(bf16)                # (N, 2E)
    h = (jnp.dot(cat, w_ref[2 * F_IN:2 * F_IN + 2 * EMBED_DIM, :],
                 preferred_element_type=f32)
         + vec_ref[3:4, :])                                              # (N, E)

    # --- global_max_pool per drug: one fused sublane-group reduce ---
    pooled = jnp.max(h.reshape(D_DRUGS, ATOMS_PER_DRUG, EMBED_DIM), axis=1)  # (D, E)

    # --- drug head: Linear -> ReLU -> LayerNorm ---
    d = (jnp.dot(pooled.astype(bf16),
                 w_ref[2 * F_IN + 2 * EMBED_DIM:, :],
                 preferred_element_type=f32)
         + vec_ref[4:5, :])
    d = jnp.maximum(d, 0.0)
    d = ln_lane(d, vec_ref[5:6, :], vec_ref[6:7, :])                     # (D, E)

    # --- fold triplet-MLP first-layer drug slices: tab = dfeat @ [W1a | W1b] ---
    tab_ref[...] = jnp.dot(d.astype(bf16), w1ab_ref[...],
                           preferred_element_type=f32)                   # (D, 2*NN0)


# =============================================================================
# Kernel B: triplet MLP, gridded over lane-major triplet blocks
# =============================================================================
def _trip_kernel(idx_ref, tab_ref, vec_ref, w2_ref, out_ref):
    f32, bf16 = jnp.float32, jnp.bfloat16
    idx = idx_ref[...]                                       # (3, Bb) int32

    # one-hot selection for (drug_a, drug_b, cell) fused into a single contraction
    iota = jax.lax.broadcasted_iota(jnp.int32, (K_SEL, B_BLOCK), 0)
    tgt = jnp.where(iota < D_DRUGS, idx[0:1, :],
                    jnp.where(iota < 2 * D_DRUGS, idx[1:2, :] + D_DRUGS,
                              idx[2:3, :] + 2 * D_DRUGS))
    sel = (iota == tgt).astype(bf16)                         # (K_SEL, Bb)

    # trip layer 1: gathers + Linear(3E -> NN0) as ONE matmul, bias, ReLU, LayerNorm
    h1 = (jnp.dot(tab_ref[...], sel, preferred_element_type=f32)
          + vec_ref[:, 0:1])                                 # (NN0, Bb)
    h1 = jnp.maximum(h1, 0.0)
    mu = jnp.mean(h1, axis=0, keepdims=True)                 # per-sample stats (f32)
    c = h1 - mu
    var = jnp.mean(c * c, axis=0, keepdims=True)
    h1 = c * jax.lax.rsqrt(var + LN_EPS) * vec_ref[:, 1:2] + vec_ref[:, 2:3]

    # trip layer 2: Linear -> ReLU
    h2 = (jnp.dot(w2_ref[...], h1.astype(bf16), preferred_element_type=f32)
          + vec_ref[0:NN[1], 3:4])                           # (NN1, Bb)
    h2 = jnp.maximum(h2, 0.0)

    # trip_predict: Linear(NN1 -> 1) as multiply + sublane reduce; lane-dense store
    out_ref[...] = (jnp.sum(h2 * vec_ref[0:NN[1], 5:6], axis=0, keepdims=True)
                    + vec_ref[0:1, 4:5])                     # (1, Bb)


# ----------------------------- wrapper ----------------------------------------
def graph_embed_forward(packed, adj, atom_features, indices):
    vmem = pl.BlockSpec(memory_space=pltpu.MemorySpace.VMEM)

    # --- kernel A: drug features, pre-projected through W1a / W1b ---
    tab_ab = pl.pallas_call(
        _drug_embed_kernel,
        out_shape=jax.ShapeDtypeStruct((D_DRUGS, 2 * NN[0]), jnp.float32),
        in_specs=[vmem] * 5,
        out_specs=vmem,
    )(adj, atom_features, packed["w_gnn"], packed["w1ab"], packed["vec_gnn"])

    # tiny once-per-forward glue: transpose (4, NN0) drug tables and append the
    # fully precomputed cell table -> single resident (NN0, K_SEL) gather table.
    tab_all_t = jnp.concatenate(
        [tab_ab[:, :NN[0]].T, tab_ab[:, NN[0]:].T, packed["cell_tab_t"]],
        axis=1).astype(jnp.bfloat16)                          # (NN0, 24)

    idx_t = indices.T.astype(jnp.int32)                       # (3, B): triplets on lanes

    # --- kernel B: per-triplet MLP, parallel grid over lane-major blocks ---
    out = pl.pallas_call(
        _trip_kernel,
        out_shape=jax.ShapeDtypeStruct((1, B_TRIPS), jnp.float32),
        grid=(B_TRIPS // B_BLOCK,),
        in_specs=[
            pl.BlockSpec((3, B_BLOCK), lambda i: (0, i)),            # idx: pipelined
            pl.BlockSpec((NN[0], K_SEL), lambda i: (0, 0)),          # table: resident
            pl.BlockSpec((NN[0], 8), lambda i: (0, 0)),              # packed vectors
            pl.BlockSpec((NN[1], NN[0]), lambda i: (0, 0)),          # W2
        ],
        out_specs=pl.BlockSpec((1, B_BLOCK), lambda i: (0, i)),      # lane-dense out
        compiler_params=pltpu.CompilerParams(
            dimension_semantics=("parallel",)),                      # v7x: 2 TCs
    )(idx_t, tab_all_t, packed["vec_trip"], packed["w2"])
    return out[0]


# ----------------------------- parameter init & packing -----------------------
def _linear(key, fan_in, fan_out, bias=True):
    kw, kb = jax.random.split(key)
    bound = 1.0 / np.sqrt(fan_in)
    w = jax.random.uniform(kw, (fan_out, fan_in), jnp.float32, -bound, bound)
    b = (jax.random.uniform(kb, (fan_out,), jnp.float32, -bound, bound)
         if bias else None)
    return w, b


def init_packed_params(key):
    keys = jax.random.split(key, 8)
    # GraphSAGE layers (SAGEConv: lin_l has bias, lin_r has none)
    wl0, bl0 = _linear(keys[0], F_IN, EMBED_DIM)
    wr0, _ = _linear(keys[1], F_IN, EMBED_DIM, bias=False)
    wl1, bl1 = _linear(keys[2], EMBED_DIM, EMBED_DIM)
    wr1, _ = _linear(keys[3], EMBED_DIM, EMBED_DIM, bias=False)
    g0, be0 = jnp.ones((EMBED_DIM,)), jnp.zeros((EMBED_DIM,))
    # drug head + its LayerNorm
    wd, bd = _linear(keys[4], EMBED_DIM, EMBED_DIM)
    gd, bed = jnp.ones((EMBED_DIM,)), jnp.zeros((EMBED_DIM,))
    # cell LayerNorm
    gc, bec = jnp.ones((EMBED_DIM,)), jnp.zeros((EMBED_DIM,))
    # trip MLP
    w1, b1 = _linear(keys[5], 3 * EMBED_DIM, NN[0])
    g1, be1 = jnp.ones((NN[0],)), jnp.zeros((NN[0],))
    w2, b2 = _linear(keys[6], NN[0], NN[1])
    wp, bp = _linear(keys[7], NN[1], 1)

    # --- kernel-A bf16 weight slab (lane width = EMBED_DIM): fused SAGE weights
    #     [wl_t ; wr_t] per layer + drug-head weight. (128, 32)
    w_gnn = jnp.concatenate([
        jnp.concatenate([wl0.T, wr0.T], axis=0),     # (2*F_IN, E)
        jnp.concatenate([wl1.T, wr1.T], axis=0),     # (2*E,    E)
        wd.T,                                        # (E,      E)
    ], axis=0).astype(jnp.bfloat16)

    # --- drug slices of the trip first-layer weight, lane-concatenated: (E, 2*NN0)
    w1_t = w1.T                                      # (3E, NN0)
    w1ab = jnp.concatenate([w1_t[:EMBED_DIM], w1_t[EMBED_DIM:2 * EMBED_DIM]],
                           axis=1).astype(jnp.bfloat16)

    # --- kernel-A small vectors packed as (8, E) f32 rows
    vec_gnn = jnp.stack([bl0, g0, be0, bl1, bd, gd, bed,
                         jnp.zeros((EMBED_DIM,), jnp.float32)], axis=0)

    # --- CellEmbed path is input-independent: fold eye -> LayerNorm -> W1c once
    eye = jnp.eye(N_CELLS, EMBED_DIM, dtype=jnp.float32)
    mu = jnp.mean(eye, axis=-1, keepdims=True)
    c = eye - mu
    var = jnp.mean(c * c, axis=-1, keepdims=True)
    cell_ln = c * jax.lax.rsqrt(var + LN_EPS) * gc + bec          # (N_CELLS, E)
    cell_tab_t = (cell_ln @ w1_t[2 * EMBED_DIM:]).T               # (NN0, N_CELLS)

    # --- kernel-B small vectors packed as (NN0, 8) f32 columns
    vec_trip = jnp.zeros((NN[0], 8), jnp.float32)
    vec_trip = vec_trip.at[:, 0].set(b1)
    vec_trip = vec_trip.at[:, 1].set(g1)
    vec_trip = vec_trip.at[:, 2].set(be1)
    vec_trip = vec_trip.at[:NN[1], 3].set(b2)
    vec_trip = vec_trip.at[0, 4].set(bp[0])
    vec_trip = vec_trip.at[:NN[1], 5].set(wp[0])

    return {
        "w_gnn": w_gnn, "w1ab": w1ab, "vec_gnn": vec_gnn,
        "cell_tab_t": cell_tab_t, "vec_trip": vec_trip,
        "w2": w2.astype(jnp.bfloat16),               # (NN1, NN0), already (out, in)
    }


# ----------------------------- main -------------------------------------------
if __name__ == "__main__":
    key = jax.random.PRNGKey(0)
    k_par, k_feat, k_idx = jax.random.split(key, 3)

    packed = init_packed_params(k_par)

    # synthetic drug graphs: ring topology per drug, concatenated (like forward())
    adj_np = np.zeros((N_ATOMS, N_ATOMS), np.float32)
    for d in range(D_DRUGS):
        off = d * ATOMS_PER_DRUG
        for a in range(ATOMS_PER_DRUG):
            s, t = off + a, off + (a + 1) % ATOMS_PER_DRUG
            adj_np[t, s] += 1.0                  # message s -> t
            adj_np[s, t] += 1.0                  # message t -> s
    deg = adj_np.sum(axis=1, keepdims=True)
    adj = jnp.asarray(adj_np / np.maximum(deg, 1.0)).astype(jnp.bfloat16)

    atom_features = jax.random.normal(
        k_feat, (N_ATOMS, F_IN), jnp.float32).astype(jnp.bfloat16)

    k0, k1, k2 = jax.random.split(k_idx, 3)
    indices = jnp.stack([
        jax.random.randint(k0, (B_TRIPS,), 0, D_DRUGS),
        jax.random.randint(k1, (B_TRIPS,), 0, D_DRUGS),
        jax.random.randint(k2, (B_TRIPS,), 0, N_CELLS),
    ], axis=-1).astype(jnp.int32)                # (B, 3), like the module's indices

    fwd = jax.jit(graph_embed_forward)
    out = fwd(packed, adj, atom_features, indices)
    out = jax.block_until_ready(out)
    assert out.shape == (B_TRIPS,) and out.dtype == jnp.float32
    assert bool(jnp.all(jnp.isfinite(out)))
    print("KERNEL_OK")
</pallas_src>

<mosaic_0001>
module attributes {stable_mosaic.version = 11 : i64} {
  func.func @_drug_embed_kernel(%arg0: memref<32x32xbf16, #tpu.memory_space<vmem>>, %arg1: memref<32x16xbf16, #tpu.memory_space<vmem>>, %arg2: memref<128x32xbf16, #tpu.memory_space<vmem>>, %arg3: memref<32x128xbf16, #tpu.memory_space<vmem>>, %arg4: memref<8x32xf32, #tpu.memory_space<vmem>>, %arg5: memref<4x128xf32, #tpu.memory_space<vmem>>) attributes {dimension_semantics = [], scalar_prefetch = 0 : i64, scratch_operands = 0 : i64, tpu.core_type = #tpu.core_type<tc>} {
    %c0 = arith.constant 0 : index
    %c0_0 = arith.constant 0 : index
    %0 = vector.load %arg0[%c0, %c0_0] : memref<32x32xbf16, #tpu.memory_space<vmem>>, vector<32x32xbf16>
    %c0_1 = arith.constant 0 : index
    %c0_2 = arith.constant 0 : index
    %1 = vector.load %arg1[%c0_1, %c0_2] : memref<32x16xbf16, #tpu.memory_space<vmem>>, vector<32x16xbf16>
    %cst = arith.constant dense<0.000000e+00> : vector<32x16xf32>
    %2 = tpu.matmul %0, %1, %cst {dimension_numbers = #tpu.dot_dimension_numbers<[1], [0], [0], [1], [0, 0, 1, 1], [], []>} : vector<32x32xbf16>, vector<32x16xbf16>, vector<32x16xf32> -> vector<32x16xf32>
    %3 = arith.extf %1 : vector<32x16xbf16> to vector<32x16xf32>
    %4 = tpu.concatenate %2, %3 in 1 : vector<32x16xf32>, vector<32x16xf32> -> vector<32x32xf32>
    %5 = arith.truncf %4 : vector<32x32xf32> to vector<32x32xbf16>
    %c0_3 = arith.constant 0 : index
    %c0_4 = arith.constant 0 : index
    %6 = vector.load %arg2[%c0_3, %c0_4] : memref<128x32xbf16, #tpu.memory_space<vmem>>, vector<32x32xbf16>
    %cst_5 = arith.constant dense<0.000000e+00> : vector<32x32xf32>
    %7 = tpu.matmul %5, %6, %cst_5 {dimension_numbers = #tpu.dot_dimension_numbers<[1], [0], [0], [1], [0, 0, 1, 1], [], []>} : vector<32x32xbf16>, vector<32x32xbf16>, vector<32x32xf32> -> vector<32x32xf32>
    %c0_6 = arith.constant 0 : index
    %c0_7 = arith.constant 0 : index
    %8 = vector.load %arg4[%c0_6, %c0_7] : memref<8x32xf32, #tpu.memory_space<vmem>>, vector<1x32xf32>
    %9 = vector.broadcast %8 : vector<1x32xf32> to vector<32x32xf32>
    %10 = arith.addf %7, %9 : vector<32x32xf32>
    %c1 = arith.constant 1 : index
    %c0_8 = arith.constant 0 : index
    %11 = vector.load %arg4[%c1, %c0_8] : memref<8x32xf32, #tpu.memory_space<vmem>>, vector<1x32xf32>
    %c2 = arith.constant 2 : index
    %c0_9 = arith.constant 0 : index
    %12 = vector.load %arg4[%c2, %c0_9] : memref<8x32xf32, #tpu.memory_space<vmem>>, vector<1x32xf32>
    %cst_10 = arith.constant dense<0.000000e+00> : vector<32xf32>
    %13 = vector.multi_reduction <add>, %10, %cst_10 [1] : vector<32x32xf32> to vector<32xf32>
    %14 = vector.shape_cast %13 : vector<32xf32> to vector<32x1xf32>
    %cst_11 = arith.constant 3.200000e+01 : f32
    %15 = vector.broadcast %cst_11 : f32 to vector<32x1xf32>
    %16 = arith.divf %14, %15 : vector<32x1xf32>
    %17 = vector.broadcast %16 : vector<32x1xf32> to vector<32x32xf32>
    %18 = arith.subf %10, %17 : vector<32x32xf32>
    %19 = arith.mulf %18, %18 : vector<32x32xf32>
    %cst_12 = arith.constant dense<0.000000e+00> : vector<32xf32>
    %20 = vector.multi_reduction <add>, %19, %cst_12 [1] : vector<32x32xf32> to vector<32xf32>
    %21 = vector.shape_cast %20 : vector<32xf32> to vector<32x1xf32>
    %cst_13 = arith.constant 3.200000e+01 : f32
    %22 = vector.broadcast %cst_13 : f32 to vector<32x1xf32>
    %23 = arith.divf %21, %22 : vector<32x1xf32>
    %cst_14 = arith.constant 9.99999974E-6 : f32
    %24 = vector.broadcast %cst_14 : f32 to vector<32x1xf32>
    %25 = arith.addf %23, %24 : vector<32x1xf32>
    %26 = math.rsqrt %25 : vector<32x1xf32>
    %27 = vector.broadcast %26 : vector<32x1xf32> to vector<32x32xf32>
    %28 = arith.mulf %18, %27 : vector<32x32xf32>
    %29 = vector.broadcast %11 : vector<1x32xf32> to vector<32x32xf32>
    %30 = arith.mulf %28, %29 : vector<32x32xf32>
    %31 = vector.broadcast %12 : vector<1x32xf32> to vector<32x32xf32>
    %32 = arith.addf %30, %31 : vector<32x32xf32>
    %cst_15 = arith.constant 0.000000e+00 : f32
    %33 = vector.broadcast %cst_15 : f32 to vector<32x32xf32>
    %34 = arith.maximumf %32, %33 : vector<32x32xf32>
    %35 = arith.truncf %34 : vector<32x32xf32> to vector<32x32xbf16>
    %cst_16 = arith.constant dense<0.000000e+00> : vector<32x32xf32>
    %36 = tpu.matmul %0, %35, %cst_16 {dimension_numbers = #tpu.dot_dimension_numbers<[1], [0], [0], [1], [0, 0, 1, 1], [], []>} : vector<32x32xbf16>, vector<32x32xbf16>, vector<32x32xf32> -> vector<32x32xf32>
    %37 = tpu.concatenate %36, %34 in 1 : vector<32x32xf32>, vector<32x32xf32> -> vector<32x64xf32>
    %38 = arith.truncf %37 : vector<32x64xf32> to vector<32x64xbf16>
    %c32 = arith.constant 32 : index
    %c0_17 = arith.constant 0 : index
    %39 = vector.load %arg2[%c32, %c0_17] : memref<128x32xbf16, #tpu.memory_space<vmem>>, vector<64x32xbf16>
    %cst_18 = arith.constant dense<0.000000e+00> : vector<32x32xf32>
    %40 = tpu.matmul %38, %39, %cst_18 {dimension_numbers = #tpu.dot_dimension_numbers<[1], [0], [0], [1], [0, 0, 1, 1], [], []>} : vector<32x64xbf16>, vector<64x32xbf16>, vector<32x32xf32> -> vector<32x32xf32>
    %c3 = arith.constant 3 : index
    %c0_19 = arith.constant 0 : index
    %41 = vector.load %arg4[%c3, %c0_19] : memref<8x32xf32, #tpu.memory_space<vmem>>, vector<1x32xf32>
    %42 = vector.broadcast %41 : vector<1x32xf32> to vector<32x32xf32>
    %43 = arith.addf %40, %42 : vector<32x32xf32>
    %44 = vector.shape_cast %43 : vector<32x32xf32> to vector<4x8x32xf32>
    %cst_20 = arith.constant dense<0xFF800000> : vector<4x32xf32>
    %45 = vector.multi_reduction <maximumf>, %44, %cst_20 [1] : vector<4x8x32xf32> to vector<4x32xf32>
    %46 = arith.truncf %45 : vector<4x32xf32> to vector<4x32xbf16>
    %c96 = arith.constant 96 : index
    %c0_21 = arith.constant 0 : index
    %47 = vector.load %arg2[%c96, %c0_21] : memref<128x32xbf16, #tpu.memory_space<vmem>>, vector<32x32xbf16>
    %cst_22 = arith.constant dense<0.000000e+00> : vector<4x32xf32>
    %48 = tpu.matmul %46, %47, %cst_22 {dimension_numbers = #tpu.dot_dimension_numbers<[1], [0], [0], [1], [0, 0, 1, 1], [], []>} : vector<4x32xbf16>, vector<32x32xbf16>, vector<4x32xf32> -> vector<4x32xf32>
    %c4 = arith.constant 4 : index
    %c0_23 = arith.constant 0 : index
    %49 = vector.load %arg4[%c4, %c0_23] : memref<8x32xf32, #tpu.memory_space<vmem>>, vector<1x32xf32>
    %50 = vector.broadcast %49 : vector<1x32xf32> to vector<4x32xf32>
    %51 = arith.addf %48, %50 : vector<4x32xf32>
    %cst_24 = arith.constant 0.000000e+00 : f32
    %52 = vector.broadcast %cst_24 : f32 to vector<4x32xf32>
    %53 = arith.maximumf %51, %52 : vector<4x32xf32>
    %c5 = arith.constant 5 : index
    %c0_25 = arith.constant 0 : index
    %54 = vector.load %arg4[%c5, %c0_25] : memref<8x32xf32, #tpu.memory_space<vmem>>, vector<1x32xf32>
    %c6 = arith.constant 6 : index
    %c0_26 = arith.constant 0 : index
    %55 = vector.load %arg4[%c6, %c0_26] : memref<8x32xf32, #tpu.memory_space<vmem>>, vector<1x32xf32>
    %cst_27 = arith.constant dense<0.000000e+00> : vector<4xf32>
    %56 = vector.multi_reduction <add>, %53, %cst_27 [1] : vector<4x32xf32> to vector<4xf32>
    %57 = vector.shape_cast %56 : vector<4xf32> to vector<4x1xf32>
    %cst_28 = arith.constant 3.200000e+01 : f32
    %58 = vector.broadcast %cst_28 : f32 to vector<4x1xf32>
    %59 = arith.divf %57, %58 : vector<4x1xf32>
    %60 = vector.broadcast %59 : vector<4x1xf32> to vector<4x32xf32>
    %61 = arith.subf %53, %60 : vector<4x32xf32>
    %62 = arith.mulf %61, %61 : vector<4x32xf32>
    %cst_29 = arith.constant dense<0.000000e+00> : vector<4xf32>
    %63 = vector.multi_reduction <add>, %62, %cst_29 [1] : vector<4x32xf32> to vector<4xf32>
    %64 = vector.shape_cast %63 : vector<4xf32> to vector<4x1xf32>
    %cst_30 = arith.constant 3.200000e+01 : f32
    %65 = vector.broadcast %cst_30 : f32 to vector<4x1xf32>
    %66 = arith.divf %64, %65 : vector<4x1xf32>
    %cst_31 = arith.constant 9.99999974E-6 : f32
    %67 = vector.broadcast %cst_31 : f32 to vector<4x1xf32>
    %68 = arith.addf %66, %67 : vector<4x1xf32>
    %69 = math.rsqrt %68 : vector<4x1xf32>
    %70 = vector.broadcast %69 : vector<4x1xf32> to vector<4x32xf32>
    %71 = arith.mulf %61, %70 : vector<4x32xf32>
    %72 = vector.broadcast %54 : vector<1x32xf32> to vector<4x32xf32>
    %73 = arith.mulf %71, %72 : vector<4x32xf32>
    %74 = vector.broadcast %55 : vector<1x32xf32> to vector<4x32xf32>
    %75 = arith.addf %73, %74 : vector<4x32xf32>
    %76 = arith.truncf %75 : vector<4x32xf32> to vector<4x32xbf16>
    %c0_32 = arith.constant 0 : index
    %c0_33 = arith.constant 0 : index
    %77 = vector.load %arg3[%c0_32, %c0_33] : memref<32x128xbf16, #tpu.memory_space<vmem>>, vector<32x128xbf16>
    %cst_34 = arith.constant dense<0.000000e+00> : vector<4x128xf32>
    %78 = tpu.matmul %76, %77, %cst_34 {dimension_numbers = #tpu.dot_dimension_numbers<[1], [0], [0], [1], [0, 0, 1, 1], [], []>} : vector<4x32xbf16>, vector<32x128xbf16>, vector<4x128xf32> -> vector<4x128xf32>
    %c0_35 = arith.constant 0 : index
    %c0_36 = arith.constant 0 : index
    %79 = vector.load %arg5[%c0_35, %c0_36] : memref<4x128xf32, #tpu.memory_space<vmem>>, vector<4x128xf32>
    tpu.vector_store %arg5[%c0_35, %c0_36], %78 {strides = array<i32>} : memref<4x128xf32, #tpu.memory_space<vmem>>, vector<4x128xf32>,
    return
  }
}

module attributes {stable_mosaic.version = 11 : i64} {
  func.func @_trip_kernel(%arg0: i32, %arg1: memref<3x128xi32, #tpu.memory_space<vmem>>, %arg2: memref<64x24xbf16, #tpu.memory_space<vmem>>, %arg3: memref<64x8xf32, #tpu.memory_space<vmem>>, %arg4: memref<32x64xbf16, #tpu.memory_space<vmem>>, %arg5: memref<1x128xf32, #tpu.memory_space<vmem>>) attributes {dimension_semantics = [#tpu.dimension_semantics<parallel>], iteration_bounds = array<i64: 2>, scalar_prefetch = 0 : i64, scratch_operands = 0 : i64, tpu.core_type = #tpu.core_type<tc>, window_params = [{transform_indices = @transform_0, window_bounds = array<i64: 3, 128>}, {pipeline_mode = #tpu.pipeline_mode<synchronous>, transform_indices = @transform_1, window_bounds = array<i64: 64, 24>}, {pipeline_mode = #tpu.pipeline_mode<synchronous>, transform_indices = @transform_2, window_bounds = array<i64: 64, 8>}, {pipeline_mode = #tpu.pipeline_mode<synchronous>, transform_indices = @transform_3, window_bounds = array<i64: 32, 64>}, {transform_indices = @transform_4, window_bounds = array<i64: 1, 128>}]} {
    %c0 = arith.constant 0 : index
    %c0_0 = arith.constant 0 : index
    %0 = vector.load %arg1[%c0, %c0_0] : memref<3x128xi32, #tpu.memory_space<vmem>>, vector<3x128xi32>
    %1 = tpu.iota {dimensions = array<i32: 0>} : vector<24x128xi32>
    %c4_i32 = arith.constant 4 : i32
    %2 = vector.broadcast %c4_i32 : i32 to vector<24x128xi32>
    %3 = arith.cmpi slt, %1, %2 : vector<24x128xi32>
    %4 = vector.extract_strided_slice %0 {offsets = [0, 0], sizes = [1, 128], strides = [1, 1]} : vector<3x128xi32> to vector<1x128xi32>
    %c8_i32 = arith.constant 8 : i32
    %5 = vector.broadcast %c8_i32 : i32 to vector<24x128xi32>
    %6 = arith.cmpi slt, %1, %5 : vector<24x128xi32>
    %7 = vector.extract_strided_slice %0 {offsets = [1, 0], sizes = [1, 128], strides = [1, 1]} : vector<3x128xi32> to vector<1x128xi32>
    %c4_i32_1 = arith.constant 4 : i32
    %8 = vector.broadcast %c4_i32_1 : i32 to vector<1x128xi32>
    %9 = arith.addi %7, %8 : vector<1x128xi32>
    %10 = vector.extract_strided_slice %0 {offsets = [2, 0], sizes = [1, 128], strides = [1, 1]} : vector<3x128xi32> to vector<1x128xi32>
    %c8_i32_2 = arith.constant 8 : i32
    %11 = vector.broadcast %c8_i32_2 : i32 to vector<1x128xi32>
    %12 = arith.addi %10, %11 : vector<1x128xi32>
    %13 = vector.shape_cast %9 : vector<1x128xi32> to vector<1x128xi32>
    %14 = vector.broadcast %13 : vector<1x128xi32> to vector<24x128xi32>
    %15 = vector.shape_cast %12 : vector<1x128xi32> to vector<1x128xi32>
    %16 = vector.broadcast %15 : vector<1x128xi32> to vector<24x128xi32>
    %17 = arith.select %6, %14, %16 : vector<24x128xi1>, vector<24x128xi32>
    %18 = vector.shape_cast %4 : vector<1x128xi32> to vector<1x128xi32>
    %19 = vector.broadcast %18 : vector<1x128xi32> to vector<24x128xi32>
    %20 = arith.select %3, %19, %17 : vector<24x128xi1>, vector<24x128xi32>
    %21 = arith.cmpi eq, %1, %20 : vector<24x128xi32>
    %22 = arith.extui %21 : vector<24x128xi1> to vector<24x128xi32>
    %23 = arith.sitofp %22 : vector<24x128xi32> to vector<24x128xf32>
    %24 = arith.truncf %23 : vector<24x128xf32> to vector<24x128xbf16>
    %c0_3 = arith.constant 0 : index
    %c0_4 = arith.constant 0 : index
    %25 = vector.load %arg2[%c0_3, %c0_4] : memref<64x24xbf16, #tpu.memory_space<vmem>>, vector<64x24xbf16>
    %cst = arith.constant dense<0.000000e+00> : vector<64x128xf32>
    %26 = tpu.matmul %25, %24, %cst {dimension_numbers = #tpu.dot_dimension_numbers<[1], [0], [0], [1], [0, 0, 1, 1], [], []>} : vector<64x24xbf16>, vector<24x128xbf16>, vector<64x128xf32> -> vector<64x128xf32>
    %c0_5 = arith.constant 0 : index
    %c0_6 = arith.constant 0 : index
    %27 = vector.load %arg3[%c0_5, %c0_6] : memref<64x8xf32, #tpu.memory_space<vmem>>, vector<64x1xf32>
    %28 = vector.broadcast %27 : vector<64x1xf32> to vector<64x128xf32>
    %29 = arith.addf %26, %28 : vector<64x128xf32>
    %cst_7 = arith.constant 0.000000e+00 : f32
    %30 = vector.broadcast %cst_7 : f32 to vector<64x128xf32>
    %31 = arith.maximumf %29, %30 : vector<64x128xf32>
    %cst_8 = arith.constant dense<0.000000e+00> : vector<128xf32>
    %32 = vector.multi_reduction <add>, %31, %cst_8 [0] : vector<64x128xf32> to vector<128xf32>
    %33 = vector.shape_cast %32 : vector<128xf32> to vector<1x128xf32>
    %cst_9 = arith.constant 6.400000e+01 : f32
    %34 = vector.broadcast %cst_9 : f32 to vector<1x128xf32>
    %35 = arith.divf %33, %34 : vector<1x128xf32>
    %36 = vector.broadcast %35 : vector<1x128xf32> to vector<64x128xf32>
    %37 = arith.subf %31, %36 : vector<64x128xf32>
    %38 = arith.mulf %37, %37 : vector<64x128xf32>
    %cst_10 = arith.constant dense<0.000000e+00> : vector<128xf32>
    %39 = vector.multi_reduction <add>, %38, %cst_10 [0] : vector<64x128xf32> to vector<128xf32>
    %40 = vector.shape_cast %39 : vector<128xf32> to vector<1x128xf32>
    %cst_11 = arith.constant 6.400000e+01 : f32
    %41 = vector.broadcast %cst_11 : f32 to vector<1x128xf32>
    %42 = arith.divf %40, %41 : vector<1x128xf32>
    %cst_12 = arith.constant 9.99999974E-6 : f32
    %43 = vector.broadcast %cst_12 : f32 to vector<1x128xf32>
    %44 = arith.addf %42, %43 : vector<1x128xf32>
    %45 = math.rsqrt %44 : vector<1x128xf32>
    %46 = vector.broadcast %45 : vector<1x128xf32> to vector<64x128xf32>
    %47 = arith.mulf %37, %46 : vector<64x128xf32>
    %c0_13 = arith.constant 0 : index
    %c1 = arith.constant 1 : index
    %48 = vector.load %arg3[%c0_13, %c1] : memref<64x8xf32, #tpu.memory_space<vmem>>, vector<64x1xf32>
    %49 = vector.broadcast %48 : vector<64x1xf32> to vector<64x128xf32>
    %50 = arith.mulf %47, %49 : vector<64x128xf32>
    %c0_14 = arith.constant 0 : index
    %c2 = arith.constant 2 : index
    %51 = vector.load %arg3[%c0_14, %c2] : memref<64x8xf32, #tpu.memory_space<vmem>>, vector<64x1xf32>
    %52 = vector.broadcast %51 : vector<64x1xf32> to vector<64x128xf32>
    %53 = arith.addf %50, %52 : vector<64x128xf32>
    %c0_15 = arith.constant 0 : index
    %c0_16 = arith.constant 0 : index
    %54 = vector.load %arg4[%c0_15, %c0_16] : memref<32x64xbf16, #tpu.memory_space<vmem>>, vector<32x64xbf16>
    %55 = arith.truncf %53 : vector<64x128xf32> to vector<64x128xbf16>
    %cst_17 = arith.constant dense<0.000000e+00> : vector<32x128xf32>
    %56 = tpu.matmul %54, %55, %cst_17 {dimension_numbers = #tpu.dot_dimension_numbers<[1], [0], [0], [1], [0, 0, 1, 1], [], []>} : vector<32x64xbf16>, vector<64x128xbf16>, vector<32x128xf32> -> vector<32x128xf32>
    %c0_18 = arith.constant 0 : index
    %c3 = arith.constant 3 : index
    %57 = vector.load %arg3[%c0_18, %c3] : memref<64x8xf32, #tpu.memory_space<vmem>>, vector<32x1xf32>
    %58 = vector.broadcast %57 : vector<32x1xf32> to vector<32x128xf32>
    %59 = arith.addf %56, %58 : vector<32x128xf32>
    %cst_19 = arith.constant 0.000000e+00 : f32
    %60 = vector.broadcast %cst_19 : f32 to vector<32x128xf32>
    %61 = arith.maximumf %59, %60 : vector<32x128xf32>
    %c0_20 = arith.constant 0 : index
    %c5 = arith.constant 5 : index
    %62 = vector.load %arg3[%c0_20, %c5] : memref<64x8xf32, #tpu.memory_space<vmem>>, vector<32x1xf32>
    %63 = vector.broadcast %62 : vector<32x1xf32> to vector<32x128xf32>
    %64 = arith.mulf %61, %63 : vector<32x128xf32>
    %cst_21 = arith.constant dense<0.000000e+00> : vector<128xf32>
    %65 = vector.multi_reduction <add>, %64, %cst_21 [0] : vector<32x128xf32> to vector<128xf32>
    %66 = vector.shape_cast %65 : vector<128xf32> to vector<1x128xf32>
    %c0_22 = arith.constant 0 : index
    %c4 = arith.constant 4 : index
    %67 = vector.load %arg3[%c0_22, %c4] : memref<64x8xf32, #tpu.memory_space<vmem>>, vector<1x1xf32>
    %68 = vector.broadcast %67 : vector<1x1xf32> to vector<1x128xf32>
    %69 = arith.addf %66, %68 : vector<1x128xf32>
    %c0_23 = arith.constant 0 : index
    %c0_24 = arith.constant 0 : index
    %70 = vector.load %arg5[%c0_23, %c0_24] : memref<1x128xf32, #tpu.memory_space<vmem>>, vector<1x128xf32>
    tpu.vector_store %arg5[%c0_23, %c0_24], %69 {strides = array<i32>} : memref<1x128xf32, #tpu.memory_space<vmem>>, vector<1x128xf32>,
    return
  }
  func.func @transform_0(%arg0: i32) -> (i32, i32) {
    %c0_i32 = arith.constant 0 : i32
    %c0_i32_0 = arith.constant 0 : i32
    return %c0_i32, %arg0 : i32, i32
  }
  func.func @transform_1(%arg0: i32) -> (i32, i32) {
    %c0_i32 = arith.constant 0 : i32
    %c0_i32_0 = arith.constant 0 : i32
    %c0_i32_1 = arith.constant 0 : i32
    return %c0_i32, %c0_i32_0 : i32, i32
  }
  func.func @transform_2(%arg0: i32) -> (i32, i32) {
    %c0_i32 = arith.constant 0 : i32
    %c0_i32_0 = arith.constant 0 : i32
    %c0_i32_1 = arith.constant 0 : i32
    return %c0_i32, %c0_i32_0 : i32, i32
  }
  func.func @transform_3(%arg0: i32) -> (i32, i32) {
    %c0_i32 = arith.constant 0 : i32
    %c0_i32_0 = arith.constant 0 : i32
    %c0_i32_1 = arith.constant 0 : i32
    return %c0_i32, %c0_i32_0 : i32, i32
  }
  func.func @transform_4(%arg0: i32) -> (i32, i32) {
    %c0_i32 = arith.constant 0 : i32
    %c0_i32_0 = arith.constant 0 : i32
    return %c0_i32, %arg0 : i32, i32
  }
}

</mosaic_0001>

<llo_original>
// kernel: graph_embed_forward.3
$region0: #{graph_embed_forward.3}
  #allocation0 [shape = 'u32[]', space=smem, size = 0x4, offset = 0x4, fixed_abs, tag = 'smem constant byte address 0x4 - core index']
  #allocation1 [shape = 'u32[72,128]{1,0:T(1,128)}', space=vmem, size = 0x9000, scoped, tag = 'internal scratch']
  %s0 = inlined_call_operand.vmem [shape: s32[3,256], index: 0, kind: input, shape index: {}]
  %s1 = inlined_call_operand.vmem [shape: bf16[64,24], index: 1, kind: input, shape index: {}]
  %s2 = inlined_call_operand.vmem [shape: f32[64,8], index: 2, kind: input, shape index: {}]
  %s3 = inlined_call_operand.vmem [shape: bf16[32,64], index: 3, kind: input, shape index: {}]
  %s4 = inlined_call_operand.hbm [shape: f32[1,256], index: 4, kind: output, shape index: {}]
  %s5 = sld [smem:[#allocation0]]
  $region49: #{graph_embed_forward.3} parent=0
    _
  %s7 = ssub.s32 1, %s5
  %s8 = scalar_select 0, %s7, %s5
  $region1: #{graph_embed_forward.3} parent=0
    #allocation2 [shape = 'u8[1024]{0}', space=vmem, size = 0x400, scoped, tag = 'output window, operand 0']
    #allocation3 [shape = 's32[2]{0}', space=sflag, size = 0x8, scoped, tag = 'scoped memory for graph_embed_forward.3']
    %9 = vsyncpa [#allocation3], 0
    %s10 = scalar_lea.sflag [#allocation3], 1
    %11 = vsyncpa %s10, 0
    loop: start=0, step=1, limit=4
    $region2: #{graph_embed_forward.3} parent=1 // loop_pre_header
      _
    $region3: #{graph_embed_forward.3} parent=1 // loop_header
      %s13 = sphi 0, %s17
      %p14 = scmp.ge.s32.totalorder %s13, 4
      %s23 = sphi 0, %s25
      %s26 = sphi 0, %s23
      %s27 = sphi 0, %s26
      %s43 = sphi 0, %s27
      %s47 = sphi 0, %s47
      %s49 = sphi 0, %s47
      %s50 = sphi 0, %s49
      %s64 = sphi 0, %s50
      %s68 = sphi 0, %s68
      %s70 = sphi 0, %s68
      %s71 = sphi 0, %s70
      %s85 = sphi 0, %s71
      %s89 = sphi 0, %s89
      %s91 = sphi 0, %s89
      %s92 = sphi 0, %s91
      %s106 = sphi 0, %s92
      %s112 = sphi 0, %s114
      %s115 = sphi 0, %s112
      %s116 = sphi 0, %s115
      %s132 = sphi 0, %s116
    $region4: #{graph_embed_forward.3} parent=1 // loop_header_branch
      %16 = sbr.rel (%p14) target = $region8
    $region5: #{graph_embed_forward.3} parent=1 // loop_body
      %s18 = ssub.s32 %s13, 1
      %s19 = ssub.s32 %s13, 2
      %s20 = sadd.s32 %s13, 1
      %s21 = ssub.s32 %s13, %s20
      %p22 = scmp.eq.s32.totalorder %s21, 0
      %s24 = sadd.s32 %s23, 1
      %s25 = scalar_select %p22, %s23, %s24
      %p28 = pneg %p22
      %p29 = scmp.eq.s32.totalorder %s13, 1
      %p30 = por %p28, %p29
      %p31 = scmp.ne.s32.totalorder %s23, %s26
      %p32 = scmp.eq.s32.totalorder %s13, 0
      %p33 = por %p31, %p32
      %p34 = scmp.ne.s32.totalorder %s23, %s26
      %p35 = scmp.eq.s32.totalorder %s18, 1
      %p36 = por %p34, %p35
      %p37 = scmp.ne.s32.totalorder %s26, %s27
      %p38 = scmp.eq.s32.totalorder %s18, 0
      %p39 = por %p37, %p38
      %p40 = scmp.ne.s32.totalorder %s26, %s27
      %p41 = scmp.eq.s32.totalorder %s19, 1
      %p42 = por %p40, %p41
      %p44 = scmp.ne.s32.totalorder %s27, %s43
      %p45 = scmp.eq.s32.totalorder %s19, 0
      %p46 = por %p44, %p45
      %s48 = sadd.s32 %s47, 1
      %p51 = scmp.eq.s32.totalorder %s13, 1
      %p52 = scmp.ne.s32.totalorder %s47, %s49
      %p53 = scmp.eq.s32.totalorder %s13, 0
      %p54 = por %p52, %p53
      %p55 = scmp.ne.s32.totalorder %s47, %s49
      %p56 = scmp.eq.s32.totalorder %s18, 1
      %p57 = por %p55, %p56
      %p58 = scmp.ne.s32.totalorder %s49, %s50
      %p59 = scmp.eq.s32.totalorder %s18, 0
      %p60 = por %p58, %p59
      %p61 = scmp.ne.s32.totalorder %s49, %s50
      %p62 = scmp.eq.s32.totalorder %s19, 1
      %p63 = por %p61, %p62
      %p65 = scmp.ne.s32.totalorder %s50, %s64
      %p66 = scmp.eq.s32.totalorder %s19, 0
      %p67 = por %p65, %p66
      %s69 = sadd.s32 %s68, 1
      %p72 = scmp.eq.s32.totalorder %s13, 1
      %p73 = scmp.ne.s32.totalorder %s68, %s70
      %p74 = scmp.eq.s32.totalorder %s13, 0
      %p75 = por %p73, %p74
      %p76 = scmp.ne.s32.totalorder %s68, %s70
      %p77 = scmp.eq.s32.totalorder %s18, 1
      %p78 = por %p76, %p77
      %p79 = scmp.ne.s32.totalorder %s70, %s71
      %p80 = scmp.eq.s32.totalorder %s18, 0
      %p81 = por %p79, %p80
      %p82 = scmp.ne.s32.totalorder %s70, %s71
      %p83 = scmp.eq.s32.totalorder %s19, 1
      %p84 = por %p82, %p83
      %p86 = scmp.ne.s32.totalorder %s71, %s85
      %p87 = scmp.eq.s32.totalorder %s19, 0
      %p88 = por %p86, %p87
      %s90 = sadd.s32 %s89, 1
      %p93 = scmp.eq.s32.totalorder %s13, 1
      %p94 = scmp.ne.s32.totalorder %s89, %s91
      %p95 = scmp.eq.s32.totalorder %s13, 0
      %p96 = por %p94, %p95
      %p97 = scmp.ne.s32.totalorder %s89, %s91
      %p98 = scmp.eq.s32.totalorder %s18, 1
      %p99 = por %p97, %p98
      %p100 = scmp.ne.s32.totalorder %s91, %s92
      %p101 = scmp.eq.s32.totalorder %s18, 0
      %p102 = por %p100, %p101
      %p103 = scmp.ne.s32.totalorder %s91, %s92
      %p104 = scmp.eq.s32.totalorder %s19, 1
      %p105 = por %p103, %p104
      %p107 = scmp.ne.s32.totalorder %s92, %s106
      %p108 = scmp.eq.s32.totalorder %s19, 0
      %p109 = por %p107, %p108
      %s110 = ssub.s32 %s13, %s20
      %p111 = scmp.eq.s32.totalorder %s110, 0
      %s113 = sadd.s32 %s112, 1
      %s114 = scalar_select %p111, %s112, %s113
      %p117 = pneg %p111
      %p118 = scmp.eq.s32.totalorder %s13, 1
      %p119 = por %p117, %p118
      %p120 = scmp.ne.s32.totalorder %s112, %s115
      %p121 = scmp.eq.s32.totalorder %s13, 0
      %p122 = por %p120, %p121
      %p123 = scmp.ne.s32.totalorder %s112, %s115
      %p124 = scmp.eq.s32.totalorder %s18, 1
      %p125 = por %p123, %p124
      %p126 = scmp.ne.s32.totalorder %s115, %s116
      %p127 = scmp.eq.s32.totalorder %s18, 0
      %p128 = por %p126, %p127
      %p129 = scmp.ne.s32.totalorder %s115, %s116
      %p130 = scmp.eq.s32.totalorder %s19, 1
      %p131 = por %p129, %p130
      %p133 = scmp.ne.s32.totalorder %s116, %s132
      %p134 = scmp.eq.s32.totalorder %s19, 0
      %p135 = por %p133, %p134
      %p136 = scmp.le.s32.totalorder 1, %s13
      %p137 = scmp.lt.s32.totalorder %s13, 3
      %p138 = pnand %p136, %p137
      %p139 = pneg %p138
      // Predicated region
      $region9: #{graph_embed_forward.3} parent=5 // pred_check
        _
      $region10: #{graph_embed_forward.3} parent=5 // pred_check_branch
        %141 = sbr.rel (%p138) target = $region12
      $region11: #{graph_embed_forward.3} parent=5 // pred_region
        %s142 = ssub.s32 %s13, 1
        // Predicated region
        $region13: #{graph_embed_forward.3} parent=11 // pred_check
          %p143 = pneg %p60
        $region14: #{graph_embed_forward.3} parent=11 // pred_check_branch
          %145 = sbr.rel (%p143) target = $region16
        $region15: #{graph_embed_forward.3} parent=11 // pred_region
          _
        $region16: #{graph_embed_forward.3} parent=11 // pred_fallthru
          _
        // Predicated region
        $region17: #{graph_embed_forward.3} parent=11 // pred_check
          %p146 = pneg %p81
        $region18: #{graph_embed_forward.3} parent=11 // pred_check_branch
          %148 = sbr.rel (%p146) target = $region20
        $region19: #{graph_embed_forward.3} parent=11 // pred_region
          _
        $region20: #{graph_embed_forward.3} parent=11 // pred_fallthru
          _
        // Predicated region
        $region21: #{graph_embed_forward.3} parent=11 // pred_check
          %p149 = pneg %p102
        $region22: #{graph_embed_forward.3} parent=11 // pred_check_branch
          %151 = sbr.rel (%p149) target = $region24
        $region23: #{graph_embed_forward.3} parent=11 // pred_region
          _
        $region24: #{graph_embed_forward.3} parent=11 // pred_fallthru
          _
      $region12: #{graph_embed_forward.3} parent=5 // pred_fallthru
        _
      %p152 = scmp.lt.s32.totalorder %s13, 2
      // Predicated region
      $region25: #{graph_embed_forward.3} parent=5 // pred_check
        %p153 = pneg %p152
      $region26: #{graph_embed_forward.3} parent=5 // pred_check_branch
        %155 = sbr.rel (%p153) target = $region28
      $region27: #{graph_embed_forward.3} parent=5 // pred_region
        // Predicated region
        $region29: #{graph_embed_forward.3} parent=27 // pred_check
          %p156 = pneg %p33
        $region30: #{graph_embed_forward.3} parent=27 // pred_check_branch
          %158 = sbr.rel (%p156) target = $region32
        $region31: #{graph_embed_forward.3} parent=27 // pred_region
          %p159 = scmp.lt.s32.totalorder %s13, 1
          %s160 = scalar_select %p159, %s13, 1
          %s161 = smul.addr %s160, 4
          %s162 = scalar_lea.vmem %s0, %s161
        $region32: #{graph_embed_forward.3} parent=27 // pred_fallthru
          _
      $region28: #{graph_embed_forward.3} parent=5 // pred_fallthru
        _
      %p163 = scmp.le.s32.totalorder 1, %s13
      %p164 = scmp.lt.s32.totalorder %s13, 3
      %p165 = pnand %p163, %p164
      %p166 = pneg %p165
      // Predicated region
      $region33: #{graph_embed_forward.3} parent=5 // pred_check
        _
      $region34: #{graph_embed_forward.3} parent=5 // pred_check_branch
        %168 = sbr.rel (%p165) target = $region36
      $region35: #{graph_embed_forward.3} parent=5 // pred_region
        %s169 = ssub.s32 %s13, 1
        %p170 = scmp.lt.s32.totalorder %s18, 1
        %s171 = scalar_select %p170, %s18, 1
        %s172 = smul.addr %s171, 4
        %s173 = scalar_lea.vmem %s0, %s172
        %p174 = pneg %p39
        %p175 = pneg %p36
        %p176 = pneg %p60
        %p177 = pneg %p57
        %p178 = pneg %p81
        %p179 = pneg %p78
        %p180 = pneg %p102
        %p181 = pneg %p99
        %p182 = pneg %p128
        %p183 = pneg %p125
        %s184 = sand.u32 %s115, 1
        %s185 = scalar_lea.sflag [#allocation3], %s184
        %s186 = sand.u32 %s115, 1
        %s187 = scalar_lea.vmem [#allocation2], %s186
        %p188 = scmp.lt.s32.totalorder %s18, 1
        %s189 = scalar_select %p188, %s18, 1
        %s190 = smul.addr %s189, 4
        %s191 = scalar_lea.vmem %s0, %s190
        %v193 = vld [vmem:[%s191] sm:$0x7]
        %v194 = vlaneseq
        %v195 = vshrl.u32 %v194, 7
        %v196 = vadd.s32 %v195, 8
        %v197 = vadd.s32 %v195, 16
        %vm198 = vcmp.lt.s32.totalorder %v195, 4
        %vm199 = vcmp.lt.s32.totalorder %v196, 4
        %vm200 = vcmp.lt.s32.totalorder %v197, 4
        %vm201 = vcmp.lt.s32.totalorder %v195, 8
        %vm202 = vcmp.lt.s32.totalorder %v196, 8
        %vm203 = vcmp.lt.s32.totalorder %v197, 8
        %v204 = vadd.s32 %v193, 4
        %v205 = vadd.s32 %v193, 8
        %v206 = vperm.slane %v204, 1
        %v207 = vperm.slane %v205, 2
        %v208 = vsel %vm201, %v206, %v207
        %v209 = vsel %vm202, %v206, %v207
        %v210 = vsel %vm203, %v206, %v207
        %v211 = vperm.slane %v193, 0
        %v212 = vsel %vm198, %v211, %v208
        %v213 = vsel %vm199, %v211, %v209
        %v214 = vsel %vm200, %v211, %v210
        %vm215 = vcmp.eq.s32.totalorder %v195, %v212
        %vm216 = vcmp.eq.s32.totalorder %v196, %v213
        %vm217 = vcmp.eq.s32.totalorder %v197, %v214
        %v218 = vsel %vm215, 1, 0
        %v219 = vsel %vm216, 1, 0
        %v220 = vsel %vm217, 1, 0
        %v221 = vcvt.s32.f32 %v218
        %v222 = vcvt.s32.f32 %v219
        %v223 = vcvt.s32.f32 %v220
        %v224 = vpack.c.bf16 %v222, %v221
        %v225 = vpack.c.bf16 %v223, %v223
        %v226 = vld [vmem:[%s1] sm:$0xf]
        %v227 = vld [vmem:[%s1 + $0x4] sm:$0xf]
        %v228 = vld [vmem:[%s1 + $0x8] sm:$0xf]
        %v229 = vld [vmem:[%s1 + $0xc] sm:$0xf]
        %v230 = vld [vmem:[%s1 + $0x10] sm:$0xf]
        %v231 = vld [vmem:[%s1 + $0x14] sm:$0xf]
        %v232 = vld [vmem:[%s1 + $0x18] sm:$0xf]
        %v233 = vld [vmem:[%s1 + $0x1c] sm:$0xf]
        %v234 = vld [vmem:[%s2] sm:$0xff]
        %v235 = vld [vmem:[%s2 + $0x8] sm:$0xff]
        %v236 = vld [vmem:[%s2 + $0x10] sm:$0xff]
        %v237 = vld [vmem:[%s2 + $0x18] sm:$0xff]
        %v238 = vld [vmem:[%s2 + $0x20] sm:$0xff]
        %v239 = vld [vmem:[%s2 + $0x28] sm:$0xff]
        %v240 = vld [vmem:[%s2 + $0x30] sm:$0xff]
        %v241 = vld [vmem:[%s2 + $0x38] sm:$0xff]
        %243 = vset.pattern.permute.xlu0 0
        %244 = vperm.xlu0 %243, %v234
        %v245 = vpop.permute.xlu0 %244
        %248 = vset.pattern.permute.xlu0 0
        %249 = vperm.xlu0 %248, %v235
        %v250 = vpop.permute.xlu0 %249
        %253 = vset.pattern.permute.xlu0 0
        %254 = vperm.xlu0 %253, %v236
        %v255 = vpop.permute.xlu0 %254
        %258 = vset.pattern.permute.xlu0 0
        %259 = vperm.xlu0 %258, %v237
        %v260 = vpop.permute.xlu0 %259
        %263 = vset.pattern.permute.xlu0 0
        %264 = vperm.xlu0 %263, %v238
        %v265 = vpop.permute.xlu0 %264
        %268 = vset.pattern.permute.xlu0 0
        %269 = vperm.xlu0 %268, %v239
        %v270 = vpop.permute.xlu0 %269
        %273 = vset.pattern.permute.xlu0 0
        %274 = vperm.xlu0 %273, %v240
        %v275 = vpop.permute.xlu0 %274
        %278 = vset.pattern.permute.xlu0 0
        %279 = vperm.xlu0 %278, %v241
        %v280 = vpop.permute.xlu0 %279
        %v290 = vunpack.c.l.b16 %v226
        %v291 = vunpack.c.l.b16 %v227
        %v292 = vunpack.c.l.b16 %v228
        %v293 = vunpack.c.l.b16 %v229
        %v294 = vunpack.c.l.b16 %v230
        %v295 = vunpack.c.l.b16 %v231
        %v296 = vunpack.c.l.b16 %v232
        %v297 = vunpack.c.l.b16 %v233
        %v298 = vpack.c.b16 %v291, %v290
        %v299 = vpack.c.b16 %v293, %v292
        %v300 = vpack.c.b16 %v295, %v294
        %v301 = vpack.c.b16 %v297, %v296
        %vm302 = vcmask 195584
        %v304 = vsel %vm302, %v298, 0
        %v307 = vsel %vm302, %v299, 0
        %v310 = vsel %vm302, %v300, 0
        %v313 = vsel %vm302, %v301, 0
        %vm315 = vcmask 1043456
        %v317 = vsel %vm315, %v225, 0
        %319 = vmatpush.bf16.msra.mxu0 0
        %320 = vmatpush.bf16.msra.mxu0 0
        %321 = vmatpush.bf16.msra.mxu0 0
        %322 = vmatpush.bf16.msra.mxu0 0
        %323 = vmatpush.bf16.msra.mxu0 0
        %324 = vmatpush.bf16.msra.mxu0 0
        %325 = vmatpush.bf16.msra.mxu0 %v317
        %326 = vmatpush.bf16.msra.mxu0 %v224
        %327 = vmatmul.bf16.gmra.mxu0 %v304
        %v328 = vpop.f32.mrf.mxu0
        %v329 = vadd.f32 %v245, %v328
        %v330 = vpop.f32.mrf.mxu0
        %v331 = vadd.f32 %v250, %v330
        %332 = vmatmul.bf16.gmra.mxu0 %v307
        %v333 = vpop.f32.mrf.mxu0
        %v334 = vadd.f32 %v255, %v333
        %v335 = vpop.f32.mrf.mxu0
        %v336 = vadd.f32 %v260, %v335
        %337 = vmatmul.bf16.gmra.mxu0 %v310
        %v338 = vpop.f32.mrf.mxu0
        %v339 = vadd.f32 %v265, %v338
        %v340 = vpop.f32.mrf.mxu0
        %v341 = vadd.f32 %v270, %v340
        %342 = vmatmul.bf16.gmra.mxu0 %v313
        %v343 = vpop.f32.mrf.mxu0
        %v344 = vadd.f32 %v275, %v343
        %v345 = vpop.f32.mrf.mxu0
        %v346 = vadd.f32 %v280, %v345
        %347 = vdwg.mxu0
        %v348 = vmax.f32 %v329, 0.0
        %v349 = vmax.f32 %v331, 0.0
        %v350 = vmax.f32 %v334, 0.0
        %v351 = vmax.f32 %v336, 0.0
        %v352 = vmax.f32 %v339, 0.0
        %v353 = vmax.f32 %v341, 0.0
        %v354 = vmax.f32 %v344, 0.0
        %v355 = vmax.f32 %v346, 0.0
        %v356 = vadd.f32 %v348, %v349
        %v357 = vadd.f32 %v356, %v350
        %v358 = vadd.f32 %v357, %v351
        %v359 = vadd.f32 %v358, %v352
        %v360 = vadd.f32 %v359, %v353
        %v361 = vadd.f32 %v360, %v354
        %v362 = vadd.f32 %v361, %v355
        %v363 = vrot.slane %v362, 4
        %v364 = vadd.f32 %v362, %v363
        %v365 = vrot.slane %v364, 2
        %v366 = vadd.f32 %v364, %v365
        %v367 = vrot.slane %v366, 1
        %v368 = vadd.f32 %v366, %v367
        %v369 = vrcp.pop 64.0
        %v370 = vmul.f32 64.0, %v369
        %v371 = vsub.f32 1.0, %v370
        %v372 = vmul.f32 %v369, %v371
        %v373 = vadd.f32 %v369, %v372
        %vm374 = vweird.f32 %v369
        %v375 = vsel %vm374, %v369, %v373
        %v376 = vmul.f32 %v368, %v375
        %v377 = vsub.f32 %v348, %v376
        %v378 = vsub.f32 %v349, %v376
        %v379 = vsub.f32 %v350, %v376
        %v380 = vsub.f32 %v351, %v376
        %v381 = vsub.f32 %v352, %v376
        %v382 = vsub.f32 %v353, %v376
        %v383 = vsub.f32 %v354, %v376
        %v384 = vsub.f32 %v355, %v376
        %v385 = vmul.f32 %v377, %v377
        %v386 = vmul.f32 %v378, %v378
        %v387 = vmul.f32 %v379, %v379
        %v388 = vmul.f32 %v380, %v380
        %v389 = vmul.f32 %v381, %v381
        %v390 = vmul.f32 %v382, %v382
        %v391 = vmul.f32 %v383, %v383
        %v392 = vmul.f32 %v384, %v384
        %v393 = vadd.f32 %v385, %v386
        %v394 = vadd.f32 %v393, %v387
        %v395 = vadd.f32 %v394, %v388
        %v396 = vadd.f32 %v395, %v389
        %v397 = vadd.f32 %v396, %v390
        %v398 = vadd.f32 %v397, %v391
        %v399 = vadd.f32 %v398, %v392
        %v400 = vrot.slane %v399, 4
        %v401 = vadd.f32 %v399, %v400
        %v402 = vrot.slane %v401, 2
        %v403 = vadd.f32 %v401, %v402
        %v404 = vrot.slane %v403, 1
        %v405 = vadd.f32 %v403, %v404
        %v406 = vmul.f32 %v405, %v375
        %v407 = vadd.f32 %v406, 1e-05
        %v408 = vrsqrt.pop %v407
        %v409 = vmul.f32 %v408, %v407
        %v410 = vmul.f32 %v409, %v408
        %v411 = vmul.f32 0.5, %v410
        %v412 = vsub.f32 1.5, %v411
        %v413 = vmul.f32 %v408, %v412
        %vm414 = vweird.f32 %v407
        %vm415 = vweird.f32 %v408
        %vm416 = vmor %vm414, %vm415
        %v417 = vsel %vm416, %v408, %v413
        %v418 = vmul.f32 %v377, %v417
        %v419 = vmul.f32 %v378, %v417
        %v420 = vmul.f32 %v379, %v417
        %v421 = vmul.f32 %v380, %v417
        %v422 = vmul.f32 %v381, %v417
        %v423 = vmul.f32 %v382, %v417
        %v424 = vmul.f32 %v383, %v417
        %v425 = vmul.f32 %v384, %v417
        %426 = vset.pattern.permute.xlu0 1
        %427 = vperm.xlu0 %426, %v234
        %v428 = vpop.permute.xlu0 %427
        %430 = vset.pattern.permute.xlu0 1
        %431 = vperm.xlu0 %430, %v235
        %v432 = vpop.permute.xlu0 %431
        %434 = vset.pattern.permute.xlu0 1
        %435 = vperm.xlu0 %434, %v236
        %v436 = vpop.permute.xlu0 %435
        %438 = vset.pattern.permute.xlu0 1
        %439 = vperm.xlu0 %438, %v237
        %v440 = vpop.permute.xlu0 %439
        %442 = vset.pattern.permute.xlu0 1
        %443 = vperm.xlu0 %442, %v238
        %v444 = vpop.permute.xlu0 %443
        %446 = vset.pattern.permute.xlu0 1
        %447 = vperm.xlu0 %446, %v239
        %v448 = vpop.permute.xlu0 %447
        %450 = vset.pattern.permute.xlu0 1
        %451 = vperm.xlu0 %450, %v240
        %v452 = vpop.permute.xlu0 %451
        %454 = vset.pattern.permute.xlu0 1
        %455 = vperm.xlu0 %454, %v241
        %v456 = vpop.permute.xlu0 %455
        %v458 = vmul.f32 %v418, %v428
        %v459 = vmul.f32 %v419, %v432
        %v460 = vmul.f32 %v420, %v436
        %v461 = vmul.f32 %v421, %v440
        %v462 = vmul.f32 %v422, %v444
        %v463 = vmul.f32 %v423, %v448
        %v464 = vmul.f32 %v424, %v452
        %v465 = vmul.f32 %v425, %v456
        %466 = vset.pattern.permute.xlu0 2
        %467 = vperm.xlu0 %466, %v234
        %v468 = vpop.permute.xlu0 %467
        %470 = vset.pattern.permute.xlu0 2
        %471 = vperm.xlu0 %470, %v235
        %v472 = vpop.permute.xlu0 %471
        %474 = vset.pattern.permute.xlu0 2
        %475 = vperm.xlu0 %474, %v236
        %v476 = vpop.permute.xlu0 %475
        %478 = vset.pattern.permute.xlu0 2
        %479 = vperm.xlu0 %478, %v237
        %v480 = vpop.permute.xlu0 %479
        %482 = vset.pattern.permute.xlu0 2
        %483 = vperm.xlu0 %482, %v238
        %v484 = vpop.permute.xlu0 %483
        %486 = vset.pattern.permute.xlu0 2
        %487 = vperm.xlu0 %486, %v239
        %v488 = vpop.permute.xlu0 %487
        %490 = vset.pattern.permute.xlu0 2
        %491 = vperm.xlu0 %490, %v240
        %v492 = vpop.permute.xlu0 %491
        %494 = vset.pattern.permute.xlu0 2
        %495 = vperm.xlu0 %494, %v241
        %v496 = vpop.permute.xlu0 %495
        %v498 = vadd.f32 %v458, %v468
        %v499 = vadd.f32 %v459, %v472
        %v500 = vadd.f32 %v460, %v476
        %v501 = vadd.f32 %v461, %v480
        %v502 = vadd.f32 %v462, %v484
        %v503 = vadd.f32 %v463, %v488
        %v504 = vadd.f32 %v464, %v492
        %v505 = vadd.f32 %v465, %v496
        %v506 = vld [vmem:[%s3] sm:$0xf]
        %v507 = vld [vmem:[%s3 + $0x4] sm:$0xf]
        %v508 = vld [vmem:[%s3 + $0x8] sm:$0xf]
        %v509 = vld [vmem:[%s3 + $0xc] sm:$0xf]
        %v510 = vpack.c.bf16 %v499, %v498
        %v511 = vpack.c.bf16 %v501, %v500
        %v512 = vpack.c.bf16 %v503, %v502
        %v513 = vpack.c.bf16 %v505, %v504
        %v514 = vld [vmem:[%s2] sm:$0xff]
        %v515 = vld [vmem:[%s2 + $0x8] sm:$0xff]
        %v516 = vld [vmem:[%s2 + $0x10] sm:$0xff]
        %v517 = vld [vmem:[%s2 + $0x18] sm:$0xff]
        %519 = vset.pattern.permute.xlu0 3
        %520 = vperm.xlu0 %519, %v514
        %v521 = vpop.permute.xlu0 %520
        %524 = vset.pattern.permute.xlu0 3
        %525 = vperm.xlu0 %524, %v515
        %v526 = vpop.permute.xlu0 %525
        %529 = vset.pattern.permute.xlu0 3
        %530 = vperm.xlu0 %529, %v516
        %v531 = vpop.permute.xlu0 %530
        %534 = vset.pattern.permute.xlu0 3
        %535 = vperm.xlu0 %534, %v517
        %v536 = vpop.permute.xlu0 %535
        %v542 = vunpack.c.l.b16 %v506
        %v543 = vunpack.c.l.b16 %v507
        %v544 = vunpack.c.l.b16 %v508
        %v545 = vunpack.c.l.b16 %v509
        %v546 = vpack.c.b16 %v543, %v542
        %v547 = vpack.c.b16 %v545, %v544
        %vm548 = vcmask 523264
        %v550 = vsel %vm548, %v546, 0
        %v553 = vsel %vm548, %v547, 0
        %555 = vmatpush.bf16.msra.mxu0 0
        %556 = vmatpush.bf16.msra.mxu0 0
        %557 = vmatpush.bf16.msra.mxu0 0
        %558 = vmatpush.bf16.msra.mxu0 0
        %559 = vmatpush.bf16.msra.mxu0 %v513
        %560 = vmatpush.bf16.msra.mxu0 %v512
        %561 = vmatpush.bf16.msra.mxu0 %v511
        %562 = vmatpush.bf16.msra.mxu0 %v510
        %563 = vmatmul.bf16.gmra.mxu0 %v550
        %v564 = vpop.f32.mrf.mxu0
        %v565 = vadd.f32 %v521, %v564
        %v566 = vpop.f32.mrf.mxu0
        %v567 = vadd.f32 %v526, %v566
        %568 = vmatmul.bf16.gmra.mxu0 %v553
        %v569 = vpop.f32.mrf.mxu0
        %v570 = vadd.f32 %v531, %v569
        %v571 = vpop.f32.mrf.mxu0
        %v572 = vadd.f32 %v536, %v571
        %573 = vdwg.mxu0
        %v574 = vmax.f32 %v565, 0.0
        %v575 = vmax.f32 %v567, 0.0
        %v576 = vmax.f32 %v570, 0.0
        %v577 = vmax.f32 %v572, 0.0
        %578 = vset.pattern.permute.xlu0 5
        %579 = vperm.xlu0 %578, %v514
        %v580 = vpop.permute.xlu0 %579
        %582 = vset.pattern.permute.xlu0 5
        %583 = vperm.xlu0 %582, %v515
        %v584 = vpop.permute.xlu0 %583
        %586 = vset.pattern.permute.xlu0 5
        %587 = vperm.xlu0 %586, %v516
        %v588 = vpop.permute.xlu0 %587
        %590 = vset.pattern.permute.xlu0 5
        %591 = vperm.xlu0 %590, %v517
        %v592 = vpop.permute.xlu0 %591
        %v594 = vmul.f32 %v574, %v580
        %v595 = vmul.f32 %v575, %v584
        %v596 = vmul.f32 %v576, %v588
        %v597 = vmul.f32 %v577, %v592
        %v598 = vadd.f32 %v594, %v595
        %v599 = vadd.f32 %v598, %v596
        %v600 = vadd.f32 %v599, %v597
        %v601 = vrot.slane %v600, 4
        %v602 = vadd.f32 %v600, %v601
        %v603 = vrot.slane %v602, 2
        %v604 = vadd.f32 %v602, %v603
        %v605 = vrot.slane %v604, 1
        %v606 = vadd.f32 %v604, %v605
        %v607 = vld [vmem:[%s2] sm:$0x1]
        %609 = vset.pattern.permute.xlu0 4
        %610 = vperm.xlu0 %609, %v607
        %v611 = vpop.permute.xlu0 %610
        %v613 = vadd.f32 %v606, %v611
        %614 = vst [vmem:[%s187] sm:$0x1] %v613
        %s615 = sand.u32 %s115, 1
        %s616 = scalar_lea.sflag [#allocation3], %s615
        %s617 = sand.u32 %s115, 1
        %s618 = scalar_lea.vmem [#allocation2], %s617
        // Predicated region
        $region37: #{graph_embed_forward.3} parent=35 // pred_check
          %p619 = pneg %p125
        $region38: #{graph_embed_forward.3} parent=35 // pred_check_branch
          %621 = sbr.rel (%p619) target = $region40
        $region39: #{graph_embed_forward.3} parent=35 // pred_region
          %623 = vsyncadd %s616, 0
          %s624 = scalar_lea.hbm %s4, %s18
          %s626 = sshll.u32 %s618, 4
          %s627 = int_to_ptr.vmem [resolvable:$true] %s626
          %s628 = sshll.u32 %s624, 4
          %s629 = int_to_ptr.hbm [resolvable:$true] %s628
          %631 = dma.vmem_to_hbm [thread:$0]  %s627, 16, %s629, %s616
        $region40: #{graph_embed_forward.3} parent=35 // pred_fallthru
          _
      $region36: #{graph_embed_forward.3} parent=5 // pred_fallthru
        _
      %p632 = scmp.le.s32.totalorder 2, %s13
      // Predicated region
      $region41: #{graph_embed_forward.3} parent=5 // pred_check
        %p633 = pneg %p632
      $region42: #{graph_embed_forward.3} parent=5 // pred_check_branch
        %635 = sbr.rel (%p633) target = $region44
      $region43: #{graph_embed_forward.3} parent=5 // pred_region
        %s636 = ssub.s32 %s13, 2
        // Predicated region
        $region45: #{graph_embed_forward.3} parent=43 // pred_check
          %p637 = pneg %p131
        $region46: #{graph_embed_forward.3} parent=43 // pred_check_branch
          %639 = sbr.rel (%p637) target = $region48
        $region47: #{graph_embed_forward.3} parent=43 // pred_region
          %s640 = sand.u32 %s116, 1
          %s641 = scalar_lea.sflag [#allocation3], %s640
          %s642 = sand.u32 %s116, 1
          %s643 = scalar_lea.vmem [#allocation2], %s642
          %645 = dma.done %s641, 16
        $region48: #{graph_embed_forward.3} parent=43 // pred_fallthru
          _
      $region44: #{graph_embed_forward.3} parent=5 // pred_fallthru
        _
    $region6: #{graph_embed_forward.3} parent=1 // loop_footer
      %s17 = sadd.s32 1, %s13
    $region7: #{graph_embed_forward.3} parent=1 // loop_footer_branch
      %12 = sbr.rel target = $region3
    $region8: #{graph_embed_forward.3} parent=1 // loop_exit
      _
    %646 = vsyncpa [#allocation3], 1
    %s647 = scalar_lea.sflag [#allocation3], 1
    %648 = vsyncpa %s647, 1

// kernel: graph_embed_forward.2
$region0: #{graph_embed_forward.2}
  #allocation0 [shape = 'u32[]', space=smem, size = 0x4, offset = 0x4, fixed_abs, tag = 'smem constant byte address 0x4 - core index']
  #allocation1 [shape = 'u32[72,128]{1,0:T(1,128)}', space=vmem, size = 0x9000, scoped, tag = 'internal scratch']
  %s0 = inlined_call_operand.vmem [shape: bf16[32,32], index: 0, kind: input, shape index: {}]
  %s1 = inlined_call_operand.vmem [shape: bf16[32,16], index: 1, kind: input, shape index: {}]
  %s2 = inlined_call_operand.vmem [shape: bf16[128,32], index: 2, kind: input, shape index: {}]
  %s3 = inlined_call_operand.vmem [shape: bf16[32,128], index: 3, kind: input, shape index: {}]
  %s4 = inlined_call_operand.vmem [shape: f32[8,32], index: 4, kind: input, shape index: {}]
  %s5 = inlined_call_operand.vmem [shape: f32[4,128], index: 5, kind: output, shape index: {}]
  %s6 = sld [smem:[#allocation0]]
  $region30: #{graph_embed_forward.2} parent=0
    _
  %s8 = ssub.s32 1, %s6
  %s9 = scalar_select 0, %s8, %s6
  // Predicated region
  $region2: #{graph_embed_forward.2} parent=0 // pred_check
    _
  $region3: #{graph_embed_forward.2} parent=0 // pred_check_branch
    %11 = sbr.rel (0) target = $region5
  $region4: #{graph_embed_forward.2} parent=0 // pred_region
    _
  $region5: #{graph_embed_forward.2} parent=0 // pred_fallthru
    _
  // Predicated region
  $region6: #{graph_embed_forward.2} parent=0 // pred_check
    _
  $region7: #{graph_embed_forward.2} parent=0 // pred_check_branch
    %13 = sbr.rel (0) target = $region9
  $region8: #{graph_embed_forward.2} parent=0 // pred_region
    _
  $region9: #{graph_embed_forward.2} parent=0 // pred_fallthru
    _
  // Predicated region
  $region10: #{graph_embed_forward.2} parent=0 // pred_check
    _
  $region11: #{graph_embed_forward.2} parent=0 // pred_check_branch
    %15 = sbr.rel (0) target = $region13
  $region12: #{graph_embed_forward.2} parent=0 // pred_region
    _
  $region13: #{graph_embed_forward.2} parent=0 // pred_fallthru
    _
  // Predicated region
  $region14: #{graph_embed_forward.2} parent=0 // pred_check
    _
  $region15: #{graph_embed_forward.2} parent=0 // pred_check_branch
    %17 = sbr.rel (0) target = $region17
  $region16: #{graph_embed_forward.2} parent=0 // pred_region
    _
  $region17: #{graph_embed_forward.2} parent=0 // pred_fallthru
    _
  // Predicated region
  $region18: #{graph_embed_forward.2} parent=0 // pred_check
    _
  $region19: #{graph_embed_forward.2} parent=0 // pred_check_branch
    %19 = sbr.rel (0) target = $region21
  $region20: #{graph_embed_forward.2} parent=0 // pred_region
    _
  $region21: #{graph_embed_forward.2} parent=0 // pred_fallthru
    _
  %v21 = vld [vmem:[%s0] sm:$0xf]
  %v22 = vld [vmem:[%s0 + $0x4] sm:$0xf]
  %v23 = vld [vmem:[%s0 + $0x8] sm:$0xf]
  %v24 = vld [vmem:[%s0 + $0xc] sm:$0xf]
  %v25 = vld [vmem:[%s1] sm:$0xf]
  %v26 = vld [vmem:[%s1 + $0x4] sm:$0xf]
  %v27 = vld [vmem:[%s1 + $0x8] sm:$0xf]
  %v28 = vld [vmem:[%s1 + $0xc] sm:$0xf]
  %v33 = vunpack.c.l.b16 %v21
  %v34 = vunpack.c.l.b16 %v22
  %v35 = vunpack.c.l.b16 %v23
  %v36 = vunpack.c.l.b16 %v24
  %v37 = vpack.c.b16 %v34, %v33
  %v38 = vpack.c.b16 %v36, %v35
  %v43 = vunpack.c.l.b16 %v25
  %v44 = vunpack.c.l.b16 %v26
  %v45 = vunpack.c.l.b16 %v27
  %v46 = vunpack.c.l.b16 %v28
  %v47 = vpack.c.b16 %v44, %v43
  %v48 = vpack.c.b16 %v46, %v45
  %vm51 = vcmask 261120
  %v53 = vsel %vm51, %v37, 0
  %v56 = vsel %vm51, %v38, 0
  %58 = vmatpush.bf16.msra.mxu0 0
  %59 = vmatpush.bf16.msra.mxu0 0
  %60 = vmatpush.bf16.msra.mxu0 0
  %61 = vmatpush.bf16.msra.mxu0 0
  %62 = vmatpush.bf16.msra.mxu0 0
  %63 = vmatpush.bf16.msra.mxu0 0
  %64 = vmatpush.bf16.msra.mxu0 %v48
  %65 = vmatpush.bf16.msra.mxu0 %v47
  %66 = vmatmul.bf16.gmra.mxu0 %v53
  %v67 = vpop.f32.mrf.mxu0
  %v68 = vadd.f32 0.0, %v67
  %v69 = vpop.f32.mrf.mxu0
  %v70 = vadd.f32 0.0, %v69
  %71 = vmatmul.bf16.gmra.mxu0 %v56
  %v72 = vpop.f32.mrf.mxu0
  %v73 = vadd.f32 0.0, %v72
  %v74 = vpop.f32.mrf.mxu0
  %v75 = vadd.f32 0.0, %v74
  %76 = vdwg.mxu0
  %v77 = vunpack.c.l.bf16 %v25
  %v78 = vunpack.c.l.bf16 %v26
  %v79 = vunpack.c.l.bf16 %v27
  %v80 = vunpack.c.l.bf16 %v28
  %85 = vrot.lane.b32.xlu0 %v77, 16
  %v86 = vpop.permute.xlu0 %85
  %87 = vrot.lane.b32.xlu0 %v78, 16
  %v88 = vpop.permute.xlu0 %87
  %89 = vrot.lane.b32.xlu0 %v79, 16
  %v90 = vpop.permute.xlu0 %89
  %91 = vrot.lane.b32.xlu0 %v80, 16
  %v92 = vpop.permute.xlu0 %91
  %vm97 = vcmask 130048
  %v98 = vsel %vm97, %v68, %v86
  %v99 = vsel %vm97, %v70, %v88
  %v100 = vsel %vm97, %v73, %v90
  %v101 = vsel %vm97, %v75, %v92
  %v102 = vpack.c.bf16 %v99, %v98
  %v103 = vpack.c.bf16 %v101, %v100
  %v104 = vld [vmem:[%s2] sm:$0xf]
  %v105 = vld [vmem:[%s2 + $0x4] sm:$0xf]
  %v106 = vld [vmem:[%s2 + $0x8] sm:$0xf]
  %v107 = vld [vmem:[%s2 + $0xc] sm:$0xf]
  %v108 = vld [vmem:[%s4] sm:$0x1]
  %v109 = vperm.slane %v108, 0
  %v114 = vunpack.c.l.b16 %v104
  %v115 = vunpack.c.l.b16 %v105
  %v116 = vunpack.c.l.b16 %v106
  %v117 = vunpack.c.l.b16 %v107
  %v118 = vpack.c.b16 %v115, %v114
  %v119 = vpack.c.b16 %v117, %v116
  %v123 = vsel %vm51, %v102, 0
  %v126 = vsel %vm51, %v103, 0
  %128 = vmatpush.bf16.msra.mxu0 0
  %129 = vmatpush.bf16.msra.mxu0 0
  %130 = vmatpush.bf16.msra.mxu0 0
  %131 = vmatpush.bf16.msra.mxu0 0
  %132 = vmatpush.bf16.msra.mxu0 0
  %133 = vmatpush.bf16.msra.mxu0 0
  %134 = vmatpush.bf16.msra.mxu0 %v119
  %135 = vmatpush.bf16.msra.mxu0 %v118
  %136 = vmatmul.bf16.gmra.mxu0 %v123
  %v137 = vpop.f32.mrf.mxu0
  %v138 = vadd.f32 %v109, %v137
  %v139 = vpop.f32.mrf.mxu0
  %v140 = vadd.f32 %v109, %v139
  %141 = vmatmul.bf16.gmra.mxu0 %v126
  %v142 = vpop.f32.mrf.mxu0
  %v143 = vadd.f32 %v109, %v142
  %v144 = vpop.f32.mrf.mxu0
  %v145 = vadd.f32 %v109, %v144
  %146 = vdwg.mxu0
  %v147 = vld [vmem:[%s4 + $0x1] sm:$0x1]
  %v148 = vld [vmem:[%s4 + $0x2] sm:$0x1]
  %v149 = vsel %vm51, %v138, 0.0
  %150 = vadd.xlane.f32.xlu0 %v149
  %v151 = vpop.xlane.xlu0 %150
  %v152 = vsel %vm51, %v140, 0.0
  %153 = vadd.xlane.f32.xlu0 %v152
  %v154 = vpop.xlane.xlu0 %153
  %v155 = vsel %vm51, %v143, 0.0
  %156 = vadd.xlane.f32.xlu0 %v155
  %v157 = vpop.xlane.xlu0 %156
  %v158 = vsel %vm51, %v145, 0.0
  %159 = vadd.xlane.f32.xlu0 %v158
  %v160 = vpop.xlane.xlu0 %159
  %v161 = vrcp.pop 32.0
  %v162 = vmul.f32 32.0, %v161
  %v163 = vsub.f32 1.0, %v162
  %v164 = vmul.f32 %v161, %v163
  %v165 = vadd.f32 %v161, %v164
  %vm166 = vweird.f32 %v161
  %v167 = vsel %vm166, %v161, %v165
  %v168 = vmul.f32 %v151, %v167
  %v169 = vmul.f32 %v154, %v167
  %v170 = vmul.f32 %v157, %v167
  %v171 = vmul.f32 %v160, %v167
  %v172 = vsub.f32 %v138, %v168
  %v173 = vsub.f32 %v140, %v169
  %v174 = vsub.f32 %v143, %v170
  %v175 = vsub.f32 %v145, %v171
  %v176 = vmul.f32 %v172, %v172
  %v177 = vmul.f32 %v173, %v173
  %v178 = vmul.f32 %v174, %v174
  %v179 = vmul.f32 %v175, %v175
  %v180 = vsel %vm51, %v176, 0.0
  %181 = vadd.xlane.f32.xlu0 %v180
  %v182 = vpop.xlane.xlu0 %181
  %v183 = vsel %vm51, %v177, 0.0
  %184 = vadd.xlane.f32.xlu0 %v183
  %v185 = vpop.xlane.xlu0 %184
  %v186 = vsel %vm51, %v178, 0.0
  %187 = vadd.xlane.f32.xlu0 %v186
  %v188 = vpop.xlane.xlu0 %187
  %v189 = vsel %vm51, %v179, 0.0
  %190 = vadd.xlane.f32.xlu0 %v189
  %v191 = vpop.xlane.xlu0 %190
  %v192 = vmul.f32 %v182, %v167
  %v193 = vmul.f32 %v185, %v167
  %v194 = vmul.f32 %v188, %v167
  %v195 = vmul.f32 %v191, %v167
  %v196 = vadd.f32 %v192, 1e-05
  %v197 = vadd.f32 %v193, 1e-05
  %v198 = vadd.f32 %v194, 1e-05
  %v199 = vadd.f32 %v195, 1e-05
  %v200 = vrsqrt.pop %v196
  %v201 = vmul.f32 %v200, %v196
  %v202 = vmul.f32 %v201, %v200
  %v203 = vmul.f32 0.5, %v202
  %v204 = vsub.f32 1.5, %v203
  %v205 = vmul.f32 %v200, %v204
  %vm206 = vweird.f32 %v196
  %vm207 = vweird.f32 %v200
  %vm208 = vmor %vm206, %vm207
  %v209 = vsel %vm208, %v200, %v205
  %v210 = vrsqrt.pop %v197
  %v211 = vmul.f32 %v210, %v197
  %v212 = vmul.f32 %v211, %v210
  %v213 = vmul.f32 0.5, %v212
  %v214 = vsub.f32 1.5, %v213
  %v215 = vmul.f32 %v210, %v214
  %vm216 = vweird.f32 %v197
  %vm217 = vweird.f32 %v210
  %vm218 = vmor %vm216, %vm217
  %v219 = vsel %vm218, %v210, %v215
  %v220 = vrsqrt.pop %v198
  %v221 = vmul.f32 %v220, %v198
  %v222 = vmul.f32 %v221, %v220
  %v223 = vmul.f32 0.5, %v222
  %v224 = vsub.f32 1.5, %v223
  %v225 = vmul.f32 %v220, %v224
  %vm226 = vweird.f32 %v198
  %vm227 = vweird.f32 %v220
  %vm228 = vmor %vm226, %vm227
  %v229 = vsel %vm228, %v220, %v225
  %v230 = vrsqrt.pop %v199
  %v231 = vmul.f32 %v230, %v199
  %v232 = vmul.f32 %v231, %v230
  %v233 = vmul.f32 0.5, %v232
  %v234 = vsub.f32 1.5, %v233
  %v235 = vmul.f32 %v230, %v234
  %vm236 = vweird.f32 %v199
  %vm237 = vweird.f32 %v230
  %vm238 = vmor %vm236, %vm237
  %v239 = vsel %vm238, %v230, %v235
  %v240 = vmul.f32 %v172, %v209
  %v241 = vmul.f32 %v173, %v219
  %v242 = vmul.f32 %v174, %v229
  %v243 = vmul.f32 %v175, %v239
  %v244 = vperm.slane %v147, 0
  %v245 = vmul.f32 %v240, %v244
  %v246 = vmul.f32 %v241, %v244
  %v247 = vmul.f32 %v242, %v244
  %v248 = vmul.f32 %v243, %v244
  %v249 = vperm.slane %v148, 0
  %v250 = vadd.f32 %v245, %v249
  %v251 = vadd.f32 %v246, %v249
  %v252 = vadd.f32 %v247, %v249
  %v253 = vadd.f32 %v248, %v249
  %v254 = vmax.f32 %v250, 0.0
  %v255 = vmax.f32 %v251, 0.0
  %v256 = vmax.f32 %v252, 0.0
  %v257 = vmax.f32 %v253, 0.0
  %v258 = vpack.c.bf16 %v255, %v254
  %v259 = vpack.c.bf16 %v257, %v256
  %260 = vmatpush.bf16.msra.mxu0 0
  %261 = vmatpush.bf16.msra.mxu0 0
  %262 = vmatpush.bf16.msra.mxu0 0
  %263 = vmatpush.bf16.msra.mxu0 0
  %264 = vmatpush.bf16.msra.mxu0 0
  %265 = vmatpush.bf16.msra.mxu0 0
  %266 = vmatpush.bf16.msra.mxu0 %v259
  %267 = vmatpush.bf16.msra.mxu0 %v258
  %268 = vmatmul.bf16.gmra.mxu0 %v53
  %v269 = vpop.f32.mrf.mxu0
  %v270 = vadd.f32 0.0, %v269
  %v271 = vpop.f32.mrf.mxu0
  %v272 = vadd.f32 0.0, %v271
  %273 = vmatmul.bf16.gmra.mxu0 %v56
  %v274 = vpop.f32.mrf.mxu0
  %v275 = vadd.f32 0.0, %v274
  %v276 = vpop.f32.mrf.mxu0
  %v277 = vadd.f32 0.0, %v276
  %278 = vdwg.mxu0
  %283 = vrot.lane.b32.xlu0 %v254, 32
  %v284 = vpop.permute.xlu0 %283
  %285 = vrot.lane.b32.xlu0 %v255, 32
  %v286 = vpop.permute.xlu0 %285
  %287 = vrot.lane.b32.xlu0 %v256, 32
  %v288 = vpop.permute.xlu0 %287
  %289 = vrot.lane.b32.xlu0 %v257, 32
  %v290 = vpop.permute.xlu0 %289
  %v295 = vsel %vm51, %v270, %v284
  %v296 = vsel %vm51, %v272, %v286
  %v297 = vsel %vm51, %v275, %v288
  %v298 = vsel %vm51, %v277, %v290
  %v299 = vpack.c.bf16 %v296, %v295
  %v300 = vpack.c.bf16 %v298, %v297
  %v301 = vld [vmem:[%s2 + $0x10] sm:$0xf]
  %v302 = vld [vmem:[%s2 + $0x14] sm:$0xf]
  %v303 = vld [vmem:[%s2 + $0x18] sm:$0xf]
  %v304 = vld [vmem:[%s2 + $0x1c] sm:$0xf]
  %v305 = vld [vmem:[%s2 + $0x20] sm:$0xf]
  %v306 = vld [vmem:[%s2 + $0x24] sm:$0xf]
  %v307 = vld [vmem:[%s2 + $0x28] sm:$0xf]
  %v308 = vld [vmem:[%s2 + $0x2c] sm:$0xf]
  %v309 = vld [vmem:[%s4 + $0x3] sm:$0x1]
  %v310 = vperm.slane %v309, 0
  %v319 = vunpack.c.l.b16 %v301
  %v320 = vunpack.c.l.b16 %v302
  %v321 = vunpack.c.l.b16 %v303
  %v322 = vunpack.c.l.b16 %v304
  %v323 = vunpack.c.l.b16 %v305
  %v324 = vunpack.c.l.b16 %v306
  %v325 = vunpack.c.l.b16 %v307
  %v326 = vunpack.c.l.b16 %v308
  %v327 = vpack.c.b16 %v320, %v319
  %v328 = vpack.c.b16 %v322, %v321
  %v329 = vpack.c.b16 %v324, %v323
  %v330 = vpack.c.b16 %v326, %v325
  %vm335 = vcmask 523264
  %v337 = vsel %vm335, %v299, 0
  %v340 = vsel %vm335, %v300, 0
  %342 = vmatpush.bf16.msra.mxu0 0
  %343 = vmatpush.bf16.msra.mxu0 0
  %344 = vmatpush.bf16.msra.mxu0 0
  %345 = vmatpush.bf16.msra.mxu0 0
  %346 = vmatpush.bf16.msra.mxu0 %v330
  %347 = vmatpush.bf16.msra.mxu0 %v329
  %348 = vmatpush.bf16.msra.mxu0 %v328
  %349 = vmatpush.bf16.msra.mxu0 %v327
  %350 = vmatmul.bf16.gmra.mxu0 %v337
  %v351 = vpop.f32.mrf.mxu0
  %v352 = vadd.f32 %v310, %v351
  %v353 = vpop.f32.mrf.mxu0
  %v354 = vadd.f32 %v310, %v353
  %355 = vmatmul.bf16.gmra.mxu0 %v340
  %v356 = vpop.f32.mrf.mxu0
  %v357 = vadd.f32 %v310, %v356
  %v358 = vpop.f32.mrf.mxu0
  %v359 = vadd.f32 %v310, %v358
  %360 = vdwg.mxu0
  %v361 = vsel %vm51, %v352, -inf
  %v362 = vrot.slane %v361, 4
  %v363 = vmax.f32 %v361, %v362
  %v364 = vrot.slane %v363, 2
  %v365 = vmax.f32 %v363, %v364
  %v366 = vrot.slane %v365, 1
  %v367 = vmax.f32 %v365, %v366
  %v368 = vsel %vm51, %v354, -inf
  %v369 = vrot.slane %v368, 4
  %v370 = vmax.f32 %v368, %v369
  %v371 = vrot.slane %v370, 2
  %v372 = vmax.f32 %v370, %v371
  %v373 = vrot.slane %v372, 1
  %v374 = vmax.f32 %v372, %v373
  %v375 = vsel %vm51, %v357, -inf
  %v376 = vrot.slane %v375, 4
  %v377 = vmax.f32 %v375, %v376
  %v378 = vrot.slane %v377, 2
  %v379 = vmax.f32 %v377, %v378
  %v380 = vrot.slane %v379, 1
  %v381 = vmax.f32 %v379, %v380
  %v382 = vsel %vm51, %v359, -inf
  %v383 = vrot.slane %v382, 4
  %v384 = vmax.f32 %v382, %v383
  %v385 = vrot.slane %v384, 2
  %v386 = vmax.f32 %v384, %v385
  %v387 = vrot.slane %v386, 1
  %v388 = vmax.f32 %v386, %v387
  %v389 = vpack.c.bf16 %v367, %v367
  %v390 = vpack.c.bf16 %v374, %v374
  %v391 = vpack.c.bf16 %v381, %v381
  %v392 = vpack.c.bf16 %v388, %v388
  %v393 = vld [vmem:[%s2 + $0x30] sm:$0xf]
  %v394 = vld [vmem:[%s2 + $0x34] sm:$0xf]
  %v395 = vld [vmem:[%s2 + $0x38] sm:$0xf]
  %v396 = vld [vmem:[%s2 + $0x3c] sm:$0xf]
  %v397 = vld [vmem:[%s4 + $0x4] sm:$0x1]
  %v398 = vperm.slane %v397, 0
  %v403 = vunpack.c.l.b16 %v389
  %v404 = vunpack.c.l.b16 %v390
  %v405 = vunpack.c.l.b16 %v391
  %v406 = vunpack.c.l.b16 %v392
  %vm407 = vcmask 1041409
  %v408 = vsel %vm407, %v404, %v403
  %vm409 = vcmask 1042434
  %v410 = vsel %vm409, %v405, %v408
  %vm411 = vcmask 1043459
  %v412 = vsel %vm411, %v406, %v410
  %v413 = vpack.c.b16 %v412, %v412
  %v418 = vunpack.c.l.b16 %v393
  %v419 = vunpack.c.l.b16 %v394
  %v420 = vunpack.c.l.b16 %v395
  %v421 = vunpack.c.l.b16 %v396
  %v422 = vpack.c.b16 %v419, %v418
  %v423 = vpack.c.b16 %v421, %v420
  %v427 = vsel %vm51, %v413, 0
  %429 = vmatpush.bf16.msra.mxu0 0
  %430 = vmatpush.bf16.msra.mxu0 0
  %431 = vmatpush.bf16.msra.mxu0 0
  %432 = vmatpush.bf16.msra.mxu0 0
  %433 = vmatpush.bf16.msra.mxu0 0
  %434 = vmatpush.bf16.msra.mxu0 0
  %435 = vmatpush.bf16.msra.mxu0 %v423
  %436 = vmatpush.bf16.msra.mxu0 %v422
  %437 = vmatmul.bf16.gmra.mxu0 %v427
  %v438 = vpop.f32.mrf.mxu0
  %v439 = vadd.f32 %v398, %v438
  %v440 = vpop.f32.mrf.mxu0
  %441 = vdwg.mxu0
  %v442 = vmax.f32 %v439, 0.0
  %v443 = vld [vmem:[%s4 + $0x5] sm:$0x1]
  %v444 = vld [vmem:[%s4 + $0x6] sm:$0x1]
  %vm445 = vcmask 257024
  %v446 = vsel %vm445, %v442, 0.0
  %447 = vadd.xlane.f32.xlu0 %v446
  %v448 = vpop.xlane.xlu0 %447
  %v449 = vmul.f32 %v448, %v167
  %v450 = vsub.f32 %v442, %v449
  %v451 = vmul.f32 %v450, %v450
  %v452 = vsel %vm445, %v451, 0.0
  %453 = vadd.xlane.f32.xlu0 %v452
  %v454 = vpop.xlane.xlu0 %453
  %v455 = vmul.f32 %v454, %v167
  %v456 = vadd.f32 %v455, 1e-05
  %v457 = vrsqrt.pop %v456
  %v458 = vmul.f32 %v457, %v456
  %v459 = vmul.f32 %v458, %v457
  %v460 = vmul.f32 0.5, %v459
  %v461 = vsub.f32 1.5, %v460
  %v462 = vmul.f32 %v457, %v461
  %vm463 = vweird.f32 %v456
  %vm464 = vweird.f32 %v457
  %vm465 = vmor %vm463, %vm464
  %v466 = vsel %vm465, %v457, %v462
  %v467 = vmul.f32 %v450, %v466
  %v468 = vperm.slane %v443, 0
  %v469 = vmul.f32 %v467, %v468
  %v470 = vperm.slane %v444, 0
  %v471 = vadd.f32 %v469, %v470
  %v472 = vpack.c.bf16 %v471, %v471
  %v473 = vld [vmem:[%s3] sm:$0xf]
  %v474 = vld [vmem:[%s3 + $0x4] sm:$0xf]
  %v475 = vld [vmem:[%s3 + $0x8] sm:$0xf]
  %v476 = vld [vmem:[%s3 + $0xc] sm:$0xf]
  %v481 = vunpack.c.l.b16 %v473
  %v482 = vunpack.c.l.b16 %v474
  %v483 = vunpack.c.l.b16 %v475
  %v484 = vunpack.c.l.b16 %v476
  %v485 = vpack.c.b16 %v482, %v481
  %v486 = vpack.c.b16 %v484, %v483
  %v490 = vsel %vm51, %v472, 0
  %492 = vmatpush.bf16.msra.mxu0 0
  %493 = vmatpush.bf16.msra.mxu0 0
  %494 = vmatpush.bf16.msra.mxu0 0
  %495 = vmatpush.bf16.msra.mxu0 0
  %496 = vmatpush.bf16.msra.mxu0 0
  %497 = vmatpush.bf16.msra.mxu0 0
  %498 = vmatpush.bf16.msra.mxu0 %v486
  %499 = vmatpush.bf16.msra.mxu0 %v485
  %500 = vmatmul.bf16.gmra.mxu0 %v490
  %v501 = vpop.f32.mrf.mxu0
  %v502 = vadd.f32 0.0, %v501
  %v503 = vpop.f32.mrf.mxu0
  %504 = vdwg.mxu0
  %505 = vst [vmem:[%s5] sm:$0xf] %v502
  // Predicated region
  $region22: #{graph_embed_forward.2} parent=0 // pred_check
    _
  $region23: #{graph_embed_forward.2} parent=0 // pred_check_branch
    %507 = sbr.rel (0) target = $region25
  $region24: #{graph_embed_forward.2} parent=0 // pred_region
    _
  $region25: #{graph_embed_forward.2} parent=0 // pred_fallthru
    _
  // Predicated region
  $region26: #{graph_embed_forward.2} parent=0 // pred_check
    _
  $region27: #{graph_embed_forward.2} parent=0 // pred_check_branch
    %509 = sbr.rel (0) target = $region29
  $region28: #{graph_embed_forward.2} parent=0 // pred_region
    _
  $region29: #{graph_embed_forward.2} parent=0 // pred_fallthru
    _

</llo_original>
